<compile_context>
chip_gen: v7x
topology: tpu7x:2x2x1
jax: 0.10.0
libtpu: 0.0.40
codegen_flags: <defaults>
</compile_context>

<pallas_src>
import functools

import jax
import jax.numpy as jnp
from jax.experimental import pallas as pl
from jax.experimental.pallas import tpu as pltpu

PRIMITIVES_skip = ["none", "skip_connect"]  # assumed ordering
_BN_EPS = 1e-5


def _pick_spatial_tile(s):
    """Spatial (lane) tile for Ho*Wo: prefer lane-dense multiples of 128 that divide s."""
    for t in (2048, 1024, 512, 256, 128):
        if s % t == 0:
            return t, s
    if s <= 4096:          # small feature maps: single full-extent spatial block
        return s, s
    # ragged large maps: zero-pad to a multiple of 512 (zeros don't perturb BN stats)
    t = 512
    return t, ((s + t - 1) // t) * t


def _vmem_limit(buf_bytes):
    return int(min(max(2 * buf_bytes + (1 << 20), 8 << 20), 64 << 20))


# ----------------------------------------------------------------------------
# Pass 1: fused ReLU + two half-width 1x1-conv dots; accumulate per-channel
# sum / sum-of-squares across all (n, spatial-tile) grid steps.  No y output.
# ----------------------------------------------------------------------------
def _fr_stats_kernel(xe_ref, xo_ref, w1_ref, w2_ref, sum_ref, ssq_ref):
    @pl.when((pl.program_id(0) == 0) & (pl.program_id(1) == 0))
    def _init():
        sum_ref[...] = jnp.zeros_like(sum_ref)
        ssq_ref[...] = jnp.zeros_like(ssq_ref)

    xe = jnp.maximum(xe_ref[0], 0)                      # ReLU commutes with the gather
    xo = jnp.maximum(xo_ref[0], 0)
    y1 = jnp.dot(w1_ref[...], xe, preferred_element_type=jnp.float32)   # (C/2, ts)
    y2 = jnp.dot(w2_ref[...], xo, preferred_element_type=jnp.float32)   # (C/2, ts)
    y = jnp.concatenate([y1, y2], axis=0)               # (C_out, ts), f32
    sum_ref[...] += jnp.sum(y, axis=-1, keepdims=True)
    ssq_ref[...] += jnp.sum(y * y, axis=-1, keepdims=True)


# ----------------------------------------------------------------------------
# Pass 2: recompute the tiny matmul and normalize with the global batch stats.
# Writes directly into the NCHW-compatible (N, C_out, Ho*Wo) layout.
# ----------------------------------------------------------------------------
def _fr_norm_kernel(xe_ref, xo_ref, w1_ref, w2_ref, sum_ref, ssq_ref, o_ref, *, inv_count):
    xe = jnp.maximum(xe_ref[0], 0)
    xo = jnp.maximum(xo_ref[0], 0)
    y1 = jnp.dot(w1_ref[...], xe, preferred_element_type=jnp.float32)
    y2 = jnp.dot(w2_ref[...], xo, preferred_element_type=jnp.float32)
    y = jnp.concatenate([y1, y2], axis=0)               # (C_out, ts), f32
    mean = sum_ref[...] * inv_count                     # (C_out, 1)
    var = ssq_ref[...] * inv_count - mean * mean
    rstd = jax.lax.rsqrt(jnp.maximum(var, 0.0) + _BN_EPS)
    o_ref[0] = ((y - mean) * rstd).astype(o_ref.dtype)


def factorized_reduce(x, w1, w2, *, compute_dtype=jnp.bfloat16):
    # x: (N, C_in, H, W) NCHW; w1, w2: torch conv layout (C_out//2, C_in, 1, 1)
    n, c_in, h, w = x.shape
    assert h % 2 == 0 and w % 2 == 0, "even spatial dims assumed (canonical FactorizedReduce)"
    c_half = w1.shape[0]
    c_out = 2 * c_half
    ho, wo = h // 2, w // 2
    s = ho * wo
    cdt = x.dtype if compute_dtype is None else compute_dtype

    # Even/even and odd/odd stride-2 views, kept NCHW (no transpose, no concat).
    xe = x[:, :, 0::2, 0::2].reshape(n, c_in, s).astype(cdt)
    xo = x[:, :, 1::2, 1::2].reshape(n, c_in, s).astype(cdt)
    w1m = w1.reshape(c_half, c_in).astype(cdt)
    w2m = w2.reshape(c_half, c_in).astype(cdt)

    ts, s_pad = _pick_spatial_tile(s)
    if s_pad != s:
        xe = jnp.pad(xe, ((0, 0), (0, 0), (0, s_pad - s)))
        xo = jnp.pad(xo, ((0, 0), (0, 0), (0, s_pad - s)))
    grid = (n, s_pad // ts)

    it_c = jnp.dtype(cdt).itemsize
    it_o = jnp.dtype(x.dtype).itemsize
    # double-buffered xe/xo tiles + weights + stat vectors
    in_bytes = 2 * (2 * c_in * ts * it_c) + 2 * (c_half * c_in * it_c) + 4 * c_out * 4

    x_spec = pl.BlockSpec((1, c_in, ts), lambda ni, ji: (ni, 0, ji))
    w_spec = pl.BlockSpec((c_half, c_in), lambda ni, ji: (0, 0))
    stat_spec = pl.BlockSpec((c_out, 1), lambda ni, ji: (0, 0))

    # Pass 1: per-channel sum / sum-of-squares only (tiny HBM output).
    csum, cssq = pl.pallas_call(
        _fr_stats_kernel,
        grid=grid,
        in_specs=[x_spec, x_spec, w_spec, w_spec],
        out_specs=(stat_spec, stat_spec),
        out_shape=(jax.ShapeDtypeStruct((c_out, 1), jnp.float32),
                   jax.ShapeDtypeStruct((c_out, 1), jnp.float32)),
        compiler_params=pltpu.CompilerParams(
            dimension_semantics=("arbitrary", "arbitrary"),   # stats carried across tiles
            vmem_limit_bytes=_vmem_limit(in_bytes),
        ),
    )(xe, xo, w1m, w2m)

    # Pass 2: recompute + normalize, fully parallel (megacore-shardable on v7x).
    out = pl.pallas_call(
        functools.partial(_fr_norm_kernel, inv_count=1.0 / float(n * s)),
        grid=grid,
        in_specs=[x_spec, x_spec, w_spec, w_spec, stat_spec, stat_spec],
        out_specs=pl.BlockSpec((1, c_out, ts), lambda ni, ji: (ni, 0, ji)),
        out_shape=jax.ShapeDtypeStruct((n, c_out, s_pad), x.dtype),
        compiler_params=pltpu.CompilerParams(
            dimension_semantics=("parallel", "parallel"),
            vmem_limit_bytes=_vmem_limit(in_bytes + 2 * c_out * ts * it_o),
        ),
    )(xe, xo, w1m, w2m, csum, cssq)

    if s_pad != s:
        out = out[:, :, :s]
    return out.reshape(n, c_out, ho, wo)                # already NCHW: free reshape


# ----------------------------------------------------------------------------
# NewCell_skip equivalent
# ----------------------------------------------------------------------------
class NewCellSkip:
    def __init__(self, c_in, c_out, chosen_op, stride=1, key=None, compute_dtype=jnp.bfloat16):
        self.c_in, self.c_out, self.stride = c_in, c_out, stride
        self.compute_dtype = compute_dtype
        self.primitive = PRIMITIVES_skip[chosen_op[1]]
        assert self.primitive == "skip_connect", "only skip_connect implemented"
        self.is_identity = (stride == 1 and c_in == c_out)
        if not self.is_identity:
            assert c_out % 2 == 0, "FactorizedReduce requires an even c_out"
            key = jax.random.PRNGKey(42) if key is None else key
            k1, k2 = jax.random.split(key)
            c_half = c_out // 2
            self.w1 = 0.1 * jax.random.normal(k1, (c_half, c_in, 1, 1), jnp.float32)
            self.w2 = 0.1 * jax.random.normal(k2, (c_half, c_in, 1, 1), jnp.float32)

    def __call__(self, x):
        if self.is_identity:
            return x  # Identity op: zero HBM traffic, no kernel needed
        return factorized_reduce(x, self.w1, self.w2, compute_dtype=self.compute_dtype)


# Pure-JAX reference for validation of the FactorizedReduce path.
def _ref_fact_reduce(x, w1, w2):
    xr = jnp.maximum(x, 0.0)
    dn = ("NCHW", "OIHW", "NCHW")
    y1 = jax.lax.conv_general_dilated(xr, w1, (2, 2), "VALID", dimension_numbers=dn)
    y2 = jax.lax.conv_general_dilated(xr[:, :, 1:, 1:], w2, (2, 2), "VALID",
                                      dimension_numbers=dn)
    y = jnp.concatenate([y1, y2], axis=1)
    mean = jnp.mean(y, axis=(0, 2, 3), keepdims=True)
    var = jnp.mean((y - mean) ** 2, axis=(0, 2, 3), keepdims=True)
    return (y - mean) / jnp.sqrt(var + _BN_EPS)


if __name__ == "__main__":
    key = jax.random.PRNGKey(0)
    x = jax.random.normal(key, (2, 4, 16, 16), jnp.float32)  # NCHW

    # Path 1: NewCell_skip(c_in=4, c_out=4, chosen_op=(·,1), stride=1) -> Identity
    cell_id = NewCellSkip(4, 4, chosen_op=(0, 1), stride=1)
    y_id = jax.block_until_ready(cell_id(x))
    assert y_id.shape == x.shape
    assert jnp.allclose(y_id, x), "identity path mismatch"

    # Path 2: reduction cell NewCell_skip(c_in=4, c_out=8, chosen_op=(·,1), stride=2)
    # S = Ho*Wo = 64 -> single spatial block, grid=(2, 1); bf16 compute (default).
    cell_rd = NewCellSkip(4, 8, chosen_op=(0, 1), stride=2)
    y_bf16 = jax.block_until_ready(cell_rd(x))
    assert y_bf16.shape == (2, 8, 8, 8)
    assert y_bf16.dtype == x.dtype

    # Same cell with f32 compute for a tight numerical check.
    cell_rd32 = NewCellSkip(4, 8, chosen_op=(0, 1), stride=2, compute_dtype=None)
    y_f32 = jax.block_until_ready(cell_rd32(x))

    y_ref = _ref_fact_reduce(x, cell_rd.w1, cell_rd.w2)
    assert jnp.allclose(y_f32, y_ref, atol=1e-4, rtol=1e-4), "f32 factorized reduce mismatch"
    assert jnp.allclose(y_bf16, y_ref, atol=5e-2, rtol=5e-2), "bf16 factorized reduce mismatch"

    print("KERNEL_OK")
</pallas_src>

<mosaic_0001>
module attributes {stable_mosaic.version = 11 : i64} {
  func.func @_fr_stats_kernel(%arg0: i32, %arg1: i32, %arg2: memref<1x4x64xbf16, #tpu.memory_space<vmem>>, %arg3: memref<1x4x64xbf16, #tpu.memory_space<vmem>>, %arg4: memref<4x4xbf16, #tpu.memory_space<vmem>>, %arg5: memref<4x4xbf16, #tpu.memory_space<vmem>>, %arg6: memref<8x1xf32, #tpu.memory_space<vmem>>, %arg7: memref<8x1xf32, #tpu.memory_space<vmem>>) attributes {dimension_semantics = [#tpu.dimension_semantics<arbitrary>, #tpu.dimension_semantics<arbitrary>], iteration_bounds = array<i64: 2, 1>, scalar_prefetch = 0 : i64, scratch_operands = 0 : i64, tpu.core_type = #tpu.core_type<tc>, window_params = [{transform_indices = @transform_0, window_bounds = array<i64: 1, 4, 64>}, {transform_indices = @transform_1, window_bounds = array<i64: 1, 4, 64>}, {pipeline_mode = #tpu.pipeline_mode<synchronous>, transform_indices = @transform_2, window_bounds = array<i64: 4, 4>}, {pipeline_mode = #tpu.pipeline_mode<synchronous>, transform_indices = @transform_3, window_bounds = array<i64: 4, 4>}, {pipeline_mode = #tpu.pipeline_mode<synchronous>, transform_indices = @transform_4, window_bounds = array<i64: 8, 1>}, {pipeline_mode = #tpu.pipeline_mode<synchronous>, transform_indices = @transform_5, window_bounds = array<i64: 8, 1>}]} {
    %c0_i32 = arith.constant 0 : i32
    %0 = arith.cmpi eq, %arg0, %c0_i32 : i32
    %c0_i32_0 = arith.constant 0 : i32
    %1 = arith.cmpi eq, %arg1, %c0_i32_0 : i32
    %2 = arith.andi %0, %1 : i1
    %3 = arith.extui %2 : i1 to i32
    %c0_i32_1 = arith.constant 0 : i32
    %4 = arith.cmpi ne, %3, %c0_i32_1 : i32
    scf.if %4 {
      %cst_24 = arith.constant 0.000000e+00 : f32
      %29 = vector.broadcast %cst_24 : f32 to vector<8x1xf32>
      %c0_25 = arith.constant 0 : index
      %c0_26 = arith.constant 0 : index
      %30 = vector.load %arg6[%c0_25, %c0_26] : memref<8x1xf32, #tpu.memory_space<vmem>>, vector<8x1xf32>
      tpu.vector_store %arg6[%c0_25, %c0_26], %29 {strides = array<i32>} : memref<8x1xf32, #tpu.memory_space<vmem>>, vector<8x1xf32>,
      %cst_27 = arith.constant 0.000000e+00 : f32
      %31 = vector.broadcast %cst_27 : f32 to vector<8x1xf32>
      %c0_28 = arith.constant 0 : index
      %c0_29 = arith.constant 0 : index
      %32 = vector.load %arg7[%c0_28, %c0_29] : memref<8x1xf32, #tpu.memory_space<vmem>>, vector<8x1xf32>
      tpu.vector_store %arg7[%c0_28, %c0_29], %31 {strides = array<i32>} : memref<8x1xf32, #tpu.memory_space<vmem>>, vector<8x1xf32>,
    } else {
    }
    %c0 = arith.constant 0 : index
    %c0_2 = arith.constant 0 : index
    %c0_3 = arith.constant 0 : index
    %5 = vector.load %arg2[%c0, %c0_2, %c0_3] : memref<1x4x64xbf16, #tpu.memory_space<vmem>>, vector<1x4x64xbf16>
    %6 = vector.shape_cast %5 : vector<1x4x64xbf16> to vector<4x64xbf16>
    %cst = arith.constant 0.000000e+00 : bf16
    %7 = vector.broadcast %cst : bf16 to vector<4x64xbf16>
    %8 = arith.maximumf %6, %7 : vector<4x64xbf16>
    %c0_4 = arith.constant 0 : index
    %c0_5 = arith.constant 0 : index
    %c0_6 = arith.constant 0 : index
    %9 = vector.load %arg3[%c0_4, %c0_5, %c0_6] : memref<1x4x64xbf16, #tpu.memory_space<vmem>>, vector<1x4x64xbf16>
    %10 = vector.shape_cast %9 : vector<1x4x64xbf16> to vector<4x64xbf16>
    %cst_7 = arith.constant 0.000000e+00 : bf16
    %11 = vector.broadcast %cst_7 : bf16 to vector<4x64xbf16>
    %12 = arith.maximumf %10, %11 : vector<4x64xbf16>
    %c0_8 = arith.constant 0 : index
    %c0_9 = arith.constant 0 : index
    %13 = vector.load %arg4[%c0_8, %c0_9] : memref<4x4xbf16, #tpu.memory_space<vmem>>, vector<4x4xbf16>
    %cst_10 = arith.constant dense<0.000000e+00> : vector<4x64xf32>
    %14 = tpu.matmul %13, %8, %cst_10 {dimension_numbers = #tpu.dot_dimension_numbers<[1], [0], [0], [1], [0, 0, 1, 1], [], []>} : vector<4x4xbf16>, vector<4x64xbf16>, vector<4x64xf32> -> vector<4x64xf32>
    %c0_11 = arith.constant 0 : index
    %c0_12 = arith.constant 0 : index
    %15 = vector.load %arg5[%c0_11, %c0_12] : memref<4x4xbf16, #tpu.memory_space<vmem>>, vector<4x4xbf16>
    %cst_13 = arith.constant dense<0.000000e+00> : vector<4x64xf32>
    %16 = tpu.matmul %15, %12, %cst_13 {dimension_numbers = #tpu.dot_dimension_numbers<[1], [0], [0], [1], [0, 0, 1, 1], [], []>} : vector<4x4xbf16>, vector<4x64xbf16>, vector<4x64xf32> -> vector<4x64xf32>
    %17 = tpu.concatenate %14, %16 in 0 : vector<4x64xf32>, vector<4x64xf32> -> vector<8x64xf32>
    %c0_14 = arith.constant 0 : index
    %c0_15 = arith.constant 0 : index
    %18 = vector.load %arg6[%c0_14, %c0_15] : memref<8x1xf32, #tpu.memory_space<vmem>>, vector<8x1xf32>
    %cst_16 = arith.constant dense<0.000000e+00> : vector<8xf32>
    %19 = vector.multi_reduction <add>, %17, %cst_16 [1] : vector<8x64xf32> to vector<8xf32>
    %20 = vector.shape_cast %19 : vector<8xf32> to vector<8x1xf32>
    %21 = arith.addf %18, %20 : vector<8x1xf32>
    %c0_17 = arith.constant 0 : index
    %c0_18 = arith.constant 0 : index
    %22 = vector.load %arg6[%c0_17, %c0_18] : memref<8x1xf32, #tpu.memory_space<vmem>>, vector<8x1xf32>
    tpu.vector_store %arg6[%c0_17, %c0_18], %21 {strides = array<i32>} : memref<8x1xf32, #tpu.memory_space<vmem>>, vector<8x1xf32>,
    %c0_19 = arith.constant 0 : index
    %c0_20 = arith.constant 0 : index
    %23 = vector.load %arg7[%c0_19, %c0_20] : memref<8x1xf32, #tpu.memory_space<vmem>>, vector<8x1xf32>
    %24 = arith.mulf %17, %17 : vector<8x64xf32>
    %cst_21 = arith.constant dense<0.000000e+00> : vector<8xf32>
    %25 = vector.multi_reduction <add>, %24, %cst_21 [1] : vector<8x64xf32> to vector<8xf32>
    %26 = vector.shape_cast %25 : vector<8xf32> to vector<8x1xf32>
    %27 = arith.addf %23, %26 : vector<8x1xf32>
    %c0_22 = arith.constant 0 : index
    %c0_23 = arith.constant 0 : index
    %28 = vector.load %arg7[%c0_22, %c0_23] : memref<8x1xf32, #tpu.memory_space<vmem>>, vector<8x1xf32>
    tpu.vector_store %arg7[%c0_22, %c0_23], %27 {strides = array<i32>} : memref<8x1xf32, #tpu.memory_space<vmem>>, vector<8x1xf32>,
    return
  }
  func.func @transform_0(%arg0: i32, %arg1: i32) -> (i32, i32, i32) {
    %c0_i32 = arith.constant 0 : i32
    %c0_i32_0 = arith.constant 0 : i32
    return %arg0, %c0_i32, %arg1 : i32, i32, i32
  }
  func.func @transform_1(%arg0: i32, %arg1: i32) -> (i32, i32, i32) {
    %c0_i32 = arith.constant 0 : i32
    %c0_i32_0 = arith.constant 0 : i32
    return %arg0, %c0_i32, %arg1 : i32, i32, i32
  }
  func.func @transform_2(%arg0: i32, %arg1: i32) -> (i32, i32) {
    %c0_i32 = arith.constant 0 : i32
    %c0_i32_0 = arith.constant 0 : i32
    %c0_i32_1 = arith.constant 0 : i32
    return %c0_i32, %c0_i32_0 : i32, i32
  }
  func.func @transform_3(%arg0: i32, %arg1: i32) -> (i32, i32) {
    %c0_i32 = arith.constant 0 : i32
    %c0_i32_0 = arith.constant 0 : i32
    %c0_i32_1 = arith.constant 0 : i32
    return %c0_i32, %c0_i32_0 : i32, i32
  }
  func.func @transform_4(%arg0: i32, %arg1: i32) -> (i32, i32) {
    %c0_i32 = arith.constant 0 : i32
    %c0_i32_0 = arith.constant 0 : i32
    %c0_i32_1 = arith.constant 0 : i32
    return %c0_i32, %c0_i32_0 : i32, i32
  }
  func.func @transform_5(%arg0: i32, %arg1: i32) -> (i32, i32) {
    %c0_i32 = arith.constant 0 : i32
    %c0_i32_0 = arith.constant 0 : i32
    %c0_i32_1 = arith.constant 0 : i32
    return %c0_i32, %c0_i32_0 : i32, i32
  }
}

</mosaic_0001>

<llo_original>
// kernel: tpu_custom_call.1
$region0: #{tpu_custom_call.1}
  #allocation0 [shape = 'u32[]', space=smem, size = 0x4, offset = 0x4, fixed_abs, tag = 'smem constant byte address 0x4 - core index']
  #allocation1 [shape = 'u32[144,128]{1,0:T(1,128)}', space=vmem, size = 0x12000, scoped, tag = 'internal scratch']
  %s0 = inlined_call_operand.hbm [shape: bf16[2,4,64], index: 0, kind: input, shape index: {}]
  %s1 = inlined_call_operand.hbm [shape: bf16[2,4,64], index: 1, kind: input, shape index: {}]
  %s2 = inlined_call_operand.vmem [shape: bf16[4,4], index: 2, kind: input, shape index: {}]
  %s3 = inlined_call_operand.vmem [shape: bf16[4,4], index: 3, kind: input, shape index: {}]
  %s4 = inlined_call_operand.vmem [shape: f32[8,1], index: 4, kind: output, shape index: {0}]
  %s5 = inlined_call_operand.vmem [shape: f32[8,1], index: 5, kind: output, shape index: {1}]
  %6 = xla_tuple %s4, %s5
  %s7 = sld [smem:[#allocation0]]
  $region69: #{tpu_custom_call.1} parent=0
    _
  %s9 = ssub.s32 1, %s7
  %s10 = scalar_select 0, %s9, %s7
  $region1: #{tpu_custom_call.1} parent=0
    #allocation2 [shape = 'u8[2048]{0}', space=vmem, size = 0x800, scoped, tag = 'input window, operand 0']
    #allocation3 [shape = 's32[2]{0}', space=sflag, size = 0x8, scoped, tag = 'scoped memory for tpu_custom_call.1']
    #allocation4 [shape = 'u8[2048]{0}', space=vmem, size = 0x800, scoped, tag = 'input window, operand 1']
    #allocation5 [shape = 's32[2]{0}', space=sflag, size = 0x8, scoped, tag = 'scoped memory for tpu_custom_call.1']
    %11 = vsyncpa [#allocation3], 0
    %s12 = scalar_lea.sflag [#allocation3], 1
    %13 = vsyncpa %s12, 0
    %14 = vsyncpa [#allocation5], 0
    %s15 = scalar_lea.sflag [#allocation5], 1
    %16 = vsyncpa %s15, 0
    loop: start=0, step=1, limit=4
    $region2: #{tpu_custom_call.1} parent=1 // loop_pre_header
      _
    $region3: #{tpu_custom_call.1} parent=1 // loop_header
      %s18 = sphi 0, %s22
      %p19 = scmp.ge.s32.totalorder %s18, 4
      %s25 = sphi 0, %s37
      %s26 = sphi 0, %s33
      %s27 = sphi 0, %s25
      %s28 = sphi 0, %s26
      %s29 = sphi 0, %s27
      %s30 = sphi 0, %s28
      %s42 = sphi 0, %s44
      %s45 = sphi 0, %s42
      %s46 = sphi 0, %s45
      %s62 = sphi 0, %s46
      %s70 = sphi 0, %s72
      %s73 = sphi 0, %s70
      %s74 = sphi 0, %s73
      %s90 = sphi 0, %s74
      %s94 = sphi 0, %s94
      %s96 = sphi 0, %s94
      %s97 = sphi 0, %s96
      %s111 = sphi 0, %s97
      %s115 = sphi 0, %s115
      %s117 = sphi 0, %s115
      %s118 = sphi 0, %s117
      %s132 = sphi 0, %s118
      %s136 = sphi 0, %s136
      %s138 = sphi 0, %s136
      %s139 = sphi 0, %s138
      %s153 = sphi 0, %s139
      %s157 = sphi 0, %s157
      %s159 = sphi 0, %s157
      %s160 = sphi 0, %s159
      %s174 = sphi 0, %s160
    $region4: #{tpu_custom_call.1} parent=1 // loop_header_branch
      %21 = sbr.rel (%p19) target = $region8
    $region5: #{tpu_custom_call.1} parent=1 // loop_body
      %s23 = ssub.s32 %s18, 1
      %s24 = ssub.s32 %s18, 2
      %s31 = sadd.s32 1, %s26
      %p32 = scmp.ge.s32.totalorder %s31, 1
      %s33 = scalar_select %p32, 0, %s31
      %s34 = sadd.s32 1, %s25
      %s35 = scalar_select %p32, %s34, %s25
      %p36 = scmp.ge.s32.totalorder %s35, 2
      %s37 = scalar_select %p36, 0, %s35
      %s38 = ssub.s32 %s25, %s37
      %s39 = ssub.s32 %s26, %s33
      %s40 = sor.u32 %s38, %s39
      %p41 = scmp.eq.s32.totalorder %s40, 0
      %s43 = sadd.s32 %s42, 1
      %s44 = scalar_select %p41, %s42, %s43
      %p47 = pneg %p41
      %p48 = scmp.eq.s32.totalorder %s18, 1
      %p49 = por %p47, %p48
      %p50 = scmp.ne.s32.totalorder %s42, %s45
      %p51 = scmp.eq.s32.totalorder %s18, 0
      %p52 = por %p50, %p51
      %p53 = scmp.ne.s32.totalorder %s42, %s45
      %p54 = scmp.eq.s32.totalorder %s23, 1
      %p55 = por %p53, %p54
      %p56 = scmp.ne.s32.totalorder %s45, %s46
      %p57 = scmp.eq.s32.totalorder %s23, 0
      %p58 = por %p56, %p57
      %p59 = scmp.ne.s32.totalorder %s45, %s46
      %p60 = scmp.eq.s32.totalorder %s24, 1
      %p61 = por %p59, %p60
      %p63 = scmp.ne.s32.totalorder %s46, %s62
      %p64 = scmp.eq.s32.totalorder %s24, 0
      %p65 = por %p63, %p64
      %s66 = ssub.s32 %s25, %s37
      %s67 = ssub.s32 %s26, %s33
      %s68 = sor.u32 %s66, %s67
      %p69 = scmp.eq.s32.totalorder %s68, 0
      %s71 = sadd.s32 %s70, 1
      %s72 = scalar_select %p69, %s70, %s71
      %p75 = pneg %p69
      %p76 = scmp.eq.s32.totalorder %s18, 1
      %p77 = por %p75, %p76
      %p78 = scmp.ne.s32.totalorder %s70, %s73
      %p79 = scmp.eq.s32.totalorder %s18, 0
      %p80 = por %p78, %p79
      %p81 = scmp.ne.s32.totalorder %s70, %s73
      %p82 = scmp.eq.s32.totalorder %s23, 1
      %p83 = por %p81, %p82
      %p84 = scmp.ne.s32.totalorder %s73, %s74
      %p85 = scmp.eq.s32.totalorder %s23, 0
      %p86 = por %p84, %p85
      %p87 = scmp.ne.s32.totalorder %s73, %s74
      %p88 = scmp.eq.s32.totalorder %s24, 1
      %p89 = por %p87, %p88
      %p91 = scmp.ne.s32.totalorder %s74, %s90
      %p92 = scmp.eq.s32.totalorder %s24, 0
      %p93 = por %p91, %p92
      %s95 = sadd.s32 %s94, 1
      %p98 = scmp.eq.s32.totalorder %s18, 1
      %p99 = scmp.ne.s32.totalorder %s94, %s96
      %p100 = scmp.eq.s32.totalorder %s18, 0
      %p101 = por %p99, %p100
      %p102 = scmp.ne.s32.totalorder %s94, %s96
      %p103 = scmp.eq.s32.totalorder %s23, 1
      %p104 = por %p102, %p103
      %p105 = scmp.ne.s32.totalorder %s96, %s97
      %p106 = scmp.eq.s32.totalorder %s23, 0
      %p107 = por %p105, %p106
      %p108 = scmp.ne.s32.totalorder %s96, %s97
      %p109 = scmp.eq.s32.totalorder %s24, 1
      %p110 = por %p108, %p109
      %p112 = scmp.ne.s32.totalorder %s97, %s111
      %p113 = scmp.eq.s32.totalorder %s24, 0
      %p114 = por %p112, %p113
      %s116 = sadd.s32 %s115, 1
      %p119 = scmp.eq.s32.totalorder %s18, 1
      %p120 = scmp.ne.s32.totalorder %s115, %s117
      %p121 = scmp.eq.s32.totalorder %s18, 0
      %p122 = por %p120, %p121
      %p123 = scmp.ne.s32.totalorder %s115, %s117
      %p124 = scmp.eq.s32.totalorder %s23, 1
      %p125 = por %p123, %p124
      %p126 = scmp.ne.s32.totalorder %s117, %s118
      %p127 = scmp.eq.s32.totalorder %s23, 0
      %p128 = por %p126, %p127
      %p129 = scmp.ne.s32.totalorder %s117, %s118
      %p130 = scmp.eq.s32.totalorder %s24, 1
      %p131 = por %p129, %p130
      %p133 = scmp.ne.s32.totalorder %s118, %s132
      %p134 = scmp.eq.s32.totalorder %s24, 0
      %p135 = por %p133, %p134
      %s137 = sadd.s32 %s136, 1
      %p140 = scmp.eq.s32.totalorder %s18, 1
      %p141 = scmp.ne.s32.totalorder %s136, %s138
      %p142 = scmp.eq.s32.totalorder %s18, 0
      %p143 = por %p141, %p142
      %p144 = scmp.ne.s32.totalorder %s136, %s138
      %p145 = scmp.eq.s32.totalorder %s23, 1
      %p146 = por %p144, %p145
      %p147 = scmp.ne.s32.totalorder %s138, %s139
      %p148 = scmp.eq.s32.totalorder %s23, 0
      %p149 = por %p147, %p148
      %p150 = scmp.ne.s32.totalorder %s138, %s139
      %p151 = scmp.eq.s32.totalorder %s24, 1
      %p152 = por %p150, %p151
      %p154 = scmp.ne.s32.totalorder %s139, %s153
      %p155 = scmp.eq.s32.totalorder %s24, 0
      %p156 = por %p154, %p155
      %s158 = sadd.s32 %s157, 1
      %p161 = scmp.eq.s32.totalorder %s18, 1
      %p162 = scmp.ne.s32.totalorder %s157, %s159
      %p163 = scmp.eq.s32.totalorder %s18, 0
      %p164 = por %p162, %p163
      %p165 = scmp.ne.s32.totalorder %s157, %s159
      %p166 = scmp.eq.s32.totalorder %s23, 1
      %p167 = por %p165, %p166
      %p168 = scmp.ne.s32.totalorder %s159, %s160
      %p169 = scmp.eq.s32.totalorder %s23, 0
      %p170 = por %p168, %p169
      %p171 = scmp.ne.s32.totalorder %s159, %s160
      %p172 = scmp.eq.s32.totalorder %s24, 1
      %p173 = por %p171, %p172
      %p175 = scmp.ne.s32.totalorder %s160, %s174
      %p176 = scmp.eq.s32.totalorder %s24, 0
      %p177 = por %p175, %p176
      %p178 = scmp.le.s32.totalorder 1, %s18
      %p179 = scmp.lt.s32.totalorder %s18, 3
      %p180 = pnand %p178, %p179
      %p181 = pneg %p180
      // Predicated region
      $region9: #{tpu_custom_call.1} parent=5 // pred_check
        _
      $region10: #{tpu_custom_call.1} parent=5 // pred_check_branch
        %183 = sbr.rel (%p180) target = $region12
      $region11: #{tpu_custom_call.1} parent=5 // pred_region
        %s184 = ssub.s32 %s18, 1
        // Predicated region
        $region13: #{tpu_custom_call.1} parent=11 // pred_check
          %p185 = pneg %p107
        $region14: #{tpu_custom_call.1} parent=11 // pred_check_branch
          %187 = sbr.rel (%p185) target = $region16
        $region15: #{tpu_custom_call.1} parent=11 // pred_region
          _
        $region16: #{tpu_custom_call.1} parent=11 // pred_fallthru
          _
        // Predicated region
        $region17: #{tpu_custom_call.1} parent=11 // pred_check
          %p188 = pneg %p128
        $region18: #{tpu_custom_call.1} parent=11 // pred_check_branch
          %190 = sbr.rel (%p188) target = $region20
        $region19: #{tpu_custom_call.1} parent=11 // pred_region
          _
        $region20: #{tpu_custom_call.1} parent=11 // pred_fallthru
          _
      $region12: #{tpu_custom_call.1} parent=5 // pred_fallthru
        _
      %p191 = scmp.lt.s32.totalorder %s18, 2
      // Predicated region
      $region21: #{tpu_custom_call.1} parent=5 // pred_check
        %p192 = pneg %p191
      $region22: #{tpu_custom_call.1} parent=5 // pred_check_branch
        %194 = sbr.rel (%p192) target = $region24
      $region23: #{tpu_custom_call.1} parent=5 // pred_region
        // Predicated region
        $region25: #{tpu_custom_call.1} parent=23 // pred_check
          %p195 = pneg %p52
        $region26: #{tpu_custom_call.1} parent=23 // pred_check_branch
          %197 = sbr.rel (%p195) target = $region28
        $region27: #{tpu_custom_call.1} parent=23 // pred_region
          %s198 = sand.u32 %s42, 1
          %s199 = scalar_lea.sflag [#allocation3], %s198
          %s200 = sand.u32 %s42, 1
          %s201 = smul.addr %s200, 2
          %s202 = scalar_lea.vmem [#allocation2], %s201
          %s204 = ssub.s32 32, 32
          %205 = vsyncadd %s199, %s204
          %s206 = sadd.s32 %s26, %s25
          %s207 = smul.addr %s206, 32
          %s208 = scalar_lea.hbm %s0, %s207
          %s210 = sshll.u32 %s202, 4
          %s211 = int_to_ptr.vmem [resolvable:$true] %s210
          %213 = dma.hbm_to_vmem [thread:$0]  %s208, 32, %s211, %s199
        $region28: #{tpu_custom_call.1} parent=23 // pred_fallthru
          _
        // Predicated region
        $region29: #{tpu_custom_call.1} parent=23 // pred_check
          %p214 = pneg %p80
        $region30: #{tpu_custom_call.1} parent=23 // pred_check_branch
          %216 = sbr.rel (%p214) target = $region32
        $region31: #{tpu_custom_call.1} parent=23 // pred_region
          %s217 = sand.u32 %s70, 1
          %s218 = scalar_lea.sflag [#allocation5], %s217
          %s219 = sand.u32 %s70, 1
          %s220 = smul.addr %s219, 2
          %s221 = scalar_lea.vmem [#allocation4], %s220
          %s223 = ssub.s32 32, 32
          %224 = vsyncadd %s218, %s223
          %s225 = sadd.s32 %s26, %s25
          %s226 = smul.addr %s225, 32
          %s227 = scalar_lea.hbm %s1, %s226
          %s229 = sshll.u32 %s221, 4
          %s230 = int_to_ptr.vmem [resolvable:$true] %s229
          %232 = dma.hbm_to_vmem [thread:$0]  %s227, 32, %s230, %s218
        $region32: #{tpu_custom_call.1} parent=23 // pred_fallthru
          _
      $region24: #{tpu_custom_call.1} parent=5 // pred_fallthru
        _
      %p233 = scmp.le.s32.totalorder 1, %s18
      %p234 = scmp.lt.s32.totalorder %s18, 3
      %p235 = pnand %p233, %p234
      %p236 = pneg %p235
      // Predicated region
      $region33: #{tpu_custom_call.1} parent=5 // pred_check
        _
      $region34: #{tpu_custom_call.1} parent=5 // pred_check_branch
        %238 = sbr.rel (%p235) target = $region36
      $region35: #{tpu_custom_call.1} parent=5 // pred_region
        %s239 = ssub.s32 %s18, 1
        %s240 = sand.u32 %s45, 1
        %s241 = scalar_lea.sflag [#allocation3], %s240
        %s242 = sand.u32 %s45, 1
        %s243 = smul.addr %s242, 2
        %s244 = scalar_lea.vmem [#allocation2], %s243
        // Predicated region
        $region37: #{tpu_custom_call.1} parent=35 // pred_check
          %p245 = pneg %p58
        $region38: #{tpu_custom_call.1} parent=35 // pred_check_branch
          %247 = sbr.rel (%p245) target = $region40
        $region39: #{tpu_custom_call.1} parent=35 // pred_region
          %248 = dma.done %s241, 32
        $region40: #{tpu_custom_call.1} parent=35 // pred_fallthru
          _
        %s249 = sand.u32 %s73, 1
        %s250 = scalar_lea.sflag [#allocation5], %s249
        %s251 = sand.u32 %s73, 1
        %s252 = smul.addr %s251, 2
        %s253 = scalar_lea.vmem [#allocation4], %s252
        // Predicated region
        $region41: #{tpu_custom_call.1} parent=35 // pred_check
          %p254 = pneg %p86
        $region42: #{tpu_custom_call.1} parent=35 // pred_check_branch
          %256 = sbr.rel (%p254) target = $region44
        $region43: #{tpu_custom_call.1} parent=35 // pred_region
          %257 = dma.done %s250, 32
        $region44: #{tpu_custom_call.1} parent=35 // pred_fallthru
          _
        %s258 = sand.u32 %s45, 1
        %s259 = scalar_lea.sflag [#allocation3], %s258
        %s260 = sand.u32 %s45, 1
        %s261 = smul.addr %s260, 2
        %s262 = scalar_lea.vmem [#allocation2], %s261
        %p263 = pneg %p58
        %p264 = pneg %p55
        %s265 = sand.u32 %s73, 1
        %s266 = scalar_lea.sflag [#allocation5], %s265
        %s267 = sand.u32 %s73, 1
        %s268 = smul.addr %s267, 2
        %s269 = scalar_lea.vmem [#allocation4], %s268
        %p270 = pneg %p86
        %p271 = pneg %p83
        %p272 = pneg %p107
        %p273 = pneg %p104
        %p274 = pneg %p128
        %p275 = pneg %p125
        %p276 = pneg %p149
        %p277 = pneg %p146
        %p278 = pneg %p170
        %p279 = pneg %p167
        %p281 = scmp.eq.s32.totalorder %s27, 0
        %p282 = scmp.eq.s32.totalorder %s28, 0
        %p283 = pnand %p281, %p282
        %p284 = pneg %p283
        // Predicated region
        $region45: #{tpu_custom_call.1} parent=35 // pred_check
          _
        $region46: #{tpu_custom_call.1} parent=35 // pred_check_branch
          %286 = sbr.rel (%p283) target = $region48
        $region47: #{tpu_custom_call.1} parent=35 // pred_region
          %vm287 = vcmask 7168
          %288 = vst.msk [vmem:[%s4] sm:$0xff] %vm287, 0.0
          %289 = vst.msk [vmem:[%s5] sm:$0xff] %vm287, 0.0
        $region48: #{tpu_custom_call.1} parent=35 // pred_fallthru
          _
        %v290 = vld [vmem:[%s244] sm:$0x3]
        %v291 = vmax.bf16 %v290, 0
        %v292 = vld [vmem:[%s253] sm:$0x3]
        %v293 = vmax.bf16 %v292, 0
        %v294 = vld [vmem:[%s2] sm:$0x3]
        %vm295 = vcmask 31744
        %v297 = vsel %vm295, %v294, 0
        %vm299 = vcmask 1041408
        %v301 = vsel %vm299, %v291, 0
        %303 = vmatprep.subr.bf16.mxu0 0
        %304 = vmatpush1.bf16.msra.mxu0 %v301
        %305 = vmatprep.subr.bf16.mxu0 0
        %306 = vmatpush1.bf16.msra.mxu0 0
        %307 = vmatprep.subr.bf16.mxu0 0
        %308 = vmatpush1.bf16.msra.mxu0 0
        %309 = vmatprep.subr.bf16.mxu0 0
        %310 = vmatpush1.bf16.msra.mxu0 0
        %311 = vmatprep.subr.bf16.mxu0 0
        %312 = vmatpush1.bf16.msra.mxu0 0
        %313 = vmatprep.subr.bf16.mxu0 0
        %314 = vmatpush1.bf16.msra.mxu0 0
        %315 = vmatprep.subr.bf16.mxu0 0
        %316 = vmatpush1.bf16.msra.mxu0 0
        %317 = vmatprep.subr.bf16.mxu0 0
        %318 = vmatpush1.bf16.msra.mxu0 0
        %319 = vmatprep.subr.bf16.mxu0 0
        %320 = vmatpush1.bf16.msra.mxu0 0
        %321 = vmatprep.subr.bf16.mxu0 0
        %322 = vmatpush1.bf16.msra.mxu0 0
        %323 = vmatprep.subr.bf16.mxu0 0
        %324 = vmatpush1.bf16.msra.mxu0 0
        %325 = vmatprep.subr.bf16.mxu0 0
        %326 = vmatpush1.bf16.msra.mxu0 0
        %327 = vmatprep.subr.bf16.mxu0 0
        %328 = vmatpush1.bf16.msra.mxu0 0
        %329 = vmatprep.subr.bf16.mxu0 0
        %330 = vmatpush1.bf16.msra.mxu0 0
        %331 = vmatprep.subr.bf16.mxu0 0
        %332 = vmatpush1.bf16.msra.mxu0 0
        %333 = vmatprep.subr.bf16.mxu0 0
        %334 = vmatpush1.bf16.msra.mxu0 0
        %335 = vmatprep.mubr.bf16.mxu0 0
        %336 = vmatmul.mubr.bf16.gmra.mrb[0].mxu0 %v297
        %v337 = vpop.f32.mrb[0].mxu0
        %v338 = vadd.f32 0.0, %v337
        %v339 = vpop.f32.mrb[0].mxu0
        %v340 = vpop.f32.mrb[0].mxu0
        %v341 = vpop.f32.mrb[0].mxu0
        %342 = vdwg.mxu0
        %v343 = vld [vmem:[%s3] sm:$0x3]
        %v345 = vsel %vm295, %v343, 0
        %v348 = vsel %vm299, %v293, 0
        %350 = vmatprep.subr.bf16.mxu0 0
        %351 = vmatpush1.bf16.msra.mxu0 %v348
        %352 = vmatprep.subr.bf16.mxu0 0
        %353 = vmatpush1.bf16.msra.mxu0 0
        %354 = vmatprep.subr.bf16.mxu0 0
        %355 = vmatpush1.bf16.msra.mxu0 0
        %356 = vmatprep.subr.bf16.mxu0 0
        %357 = vmatpush1.bf16.msra.mxu0 0
        %358 = vmatprep.subr.bf16.mxu0 0
        %359 = vmatpush1.bf16.msra.mxu0 0
        %360 = vmatprep.subr.bf16.mxu0 0
        %361 = vmatpush1.bf16.msra.mxu0 0
        %362 = vmatprep.subr.bf16.mxu0 0
        %363 = vmatpush1.bf16.msra.mxu0 0
        %364 = vmatprep.subr.bf16.mxu0 0
        %365 = vmatpush1.bf16.msra.mxu0 0
        %366 = vmatprep.subr.bf16.mxu0 0
        %367 = vmatpush1.bf16.msra.mxu0 0
        %368 = vmatprep.subr.bf16.mxu0 0
        %369 = vmatpush1.bf16.msra.mxu0 0
        %370 = vmatprep.subr.bf16.mxu0 0
        %371 = vmatpush1.bf16.msra.mxu0 0
        %372 = vmatprep.subr.bf16.mxu0 0
        %373 = vmatpush1.bf16.msra.mxu0 0
        %374 = vmatprep.subr.bf16.mxu0 0
        %375 = vmatpush1.bf16.msra.mxu0 0
        %376 = vmatprep.subr.bf16.mxu0 0
        %377 = vmatpush1.bf16.msra.mxu0 0
        %378 = vmatprep.subr.bf16.mxu0 0
        %379 = vmatpush1.bf16.msra.mxu0 0
        %380 = vmatprep.subr.bf16.mxu0 0
        %381 = vmatpush1.bf16.msra.mxu0 0
        %382 = vmatprep.mubr.bf16.mxu0 0
        %383 = vmatmul.mubr.bf16.gmra.mrb[0].mxu0 %v345
        %v384 = vpop.f32.mrb[0].mxu0
        %v385 = vadd.f32 0.0, %v384
        %v386 = vpop.f32.mrb[0].mxu0
        %v387 = vpop.f32.mrb[0].mxu0
        %v388 = vpop.f32.mrb[0].mxu0
        %389 = vdwg.mxu0
        %v391 = vrot.slane %v385, 4
        %vm393 = vcmask 1043456
        %v394 = vsel %vm393, %v338, %v391
        %v395 = vld [vmem:[%s4] sm:$0xff]
        %vm396 = vcmask 523264
        %v397 = vsel %vm396, %v394, 0.0
        %398 = vadd.xlane.f32.xlu0 %v397
        %v399 = vpop.xlane.xlu0 %398
        %v400 = vadd.f32 %v395, %v399
        %vm401 = vcmask 7168
        %402 = vst.msk [vmem:[%s4] sm:$0xff] %vm401, %v400
        %v403 = vld [vmem:[%s5] sm:$0xff]
        %v404 = vmul.f32 %v394, %v394
        %v405 = vsel %vm396, %v404, 0.0
        %406 = vadd.xlane.f32.xlu0 %v405
        %v407 = vpop.xlane.xlu0 %406
        %v408 = vadd.f32 %v403, %v407
        %409 = vst.msk [vmem:[%s5] sm:$0xff] %vm401, %v408
        // Predicated region
        $region49: #{tpu_custom_call.1} parent=35 // pred_check
          %p410 = pneg %p146
        $region50: #{tpu_custom_call.1} parent=35 // pred_check_branch
          %412 = sbr.rel (%p410) target = $region52
        $region51: #{tpu_custom_call.1} parent=35 // pred_region
          _
        $region52: #{tpu_custom_call.1} parent=35 // pred_fallthru
          _
        // Predicated region
        $region53: #{tpu_custom_call.1} parent=35 // pred_check
          %p413 = pneg %p167
        $region54: #{tpu_custom_call.1} parent=35 // pred_check_branch
          %415 = sbr.rel (%p413) target = $region56
        $region55: #{tpu_custom_call.1} parent=35 // pred_region
          _
        $region56: #{tpu_custom_call.1} parent=35 // pred_fallthru
          _
        // Predicated region
        $region57: #{tpu_custom_call.1} parent=35 // pred_check
          %p416 = pneg %p146
        $region58: #{tpu_custom_call.1} parent=35 // pred_check_branch
          %418 = sbr.rel (%p416) target = $region60
        $region59: #{tpu_custom_call.1} parent=35 // pred_region
          _
        $region60: #{tpu_custom_call.1} parent=35 // pred_fallthru
          _
        // Predicated region
        $region61: #{tpu_custom_call.1} parent=35 // pred_check
          %p419 = pneg %p167
        $region62: #{tpu_custom_call.1} parent=35 // pred_check_branch
          %421 = sbr.rel (%p419) target = $region64
        $region63: #{tpu_custom_call.1} parent=35 // pred_region
          _
        $region64: #{tpu_custom_call.1} parent=35 // pred_fallthru
          _
      $region36: #{tpu_custom_call.1} parent=5 // pred_fallthru
        _
      %p422 = scmp.le.s32.totalorder 2, %s18
      // Predicated region
      $region65: #{tpu_custom_call.1} parent=5 // pred_check
        %p423 = pneg %p422
      $region66: #{tpu_custom_call.1} parent=5 // pred_check_branch
        %425 = sbr.rel (%p423) target = $region68
      $region67: #{tpu_custom_call.1} parent=5 // pred_region
        %s426 = ssub.s32 %s18, 2
      $region68: #{tpu_custom_call.1} parent=5 // pred_fallthru
        _
    $region6: #{tpu_custom_call.1} parent=1 // loop_footer
      %s22 = sadd.s32 1, %s18
    $region7: #{tpu_custom_call.1} parent=1 // loop_footer_branch
      %17 = sbr.rel target = $region3
    $region8: #{tpu_custom_call.1} parent=1 // loop_exit
      _
    %427 = vsyncpa [#allocation3], 1
    %s428 = scalar_lea.sflag [#allocation3], 1
    %429 = vsyncpa %s428, 1
    %430 = vsyncpa [#allocation5], 1
    %s431 = scalar_lea.sflag [#allocation5], 1
    %432 = vsyncpa %s431, 1

</llo_original>
